<compile_context>
chip_gen: v6e
topology: v6e:2x2x1
jax: 0.10.0
libtpu: 0.0.40
codegen_flags: <defaults>
</compile_context>

<pallas_src>
import functools

import jax
import jax.numpy as jnp
from jax import lax
from jax.experimental import pallas as pl
from jax.experimental.pallas import tpu as pltpu


def _round_up(x, m):
    return (x + m - 1) // m * m


def _mlp_kernel(x_ref, w1_ref, wr_ref, b_ref, out_ref, *, f_h):
    """One batch tile of the 5-layer MLP.

    x_ref  : (tb, F_in)   input block, natural (batch, feature) layout
    w1_ref : (F_h, F_in)  fc1 weight (torch (out, in) convention), zero-padded rows
    wr_ref : (4*F_h, F_h) fc2..fc5 weights, each zero-padded to (F_h, F_h)
    b_ref  : (5*F_h, 1)   biases, zero-padded
    out_ref: (1, tb)      lane-dense q-values (batch on lanes)
    """
    x = x_ref[...]                                          # (tb, F_in) f32

    # Layer 1 folds the (batch, feat) -> (feat, batch) transpose into the matmul:
    #   h1^T = W1 @ x^T  (contract the feature dim of BOTH operands, q@k^T style).
    h = lax.dot_general(
        w1_ref[...], x,
        dimension_numbers=(((1,), (1,)), ((), ())),
        preferred_element_type=jnp.float32)                 # (F_h, tb)
    h = jnp.maximum(h + b_ref[0:f_h, :], 0.0)

    # Layers 2..5 stay in the transposed, lane-dense layout: h_l = W_l @ h + b_l.
    for i, act in enumerate(("relu", "relu", "tanh", "none")):
        w = wr_ref[i * f_h:(i + 1) * f_h, :]                # (F_h, F_h) static, 8-aligned
        b = b_ref[(i + 1) * f_h:(i + 2) * f_h, :]           # (F_h, 1)  lane-broadcast
        h = jnp.dot(w, h, preferred_element_type=jnp.float32) + b
        if act == "relu":
            h = jnp.maximum(h, 0.0)
        elif act == "tanh":
            h = jnp.tanh(h)

    out_ref[...] = h[0:1, :]                                # fc5 output row, lane-dense


def pack_params(params):
    """Pack torch-convention (out,in)/(out,) params.

    Returns:
      w1_packed : (F_h, input_size)  fc1, rows zero-padded to F_h
      w_rest    : (4*F_h, F_h)       fc2..fc5, each zero-padded to (F_h, F_h)
      b_packed  : (5*F_h, 1)         all biases, zero-padded
    """
    f_h = _round_up(max(w.shape[0] for w, _ in params), 8)  # = 24 for this net
    (w1, b1), rest = params[0], params[1:]
    input_size = w1.shape[1]

    w1_packed = jnp.zeros((f_h, input_size), jnp.float32).at[:w1.shape[0], :].set(w1)
    w_rest = jnp.zeros((len(rest) * f_h, f_h), jnp.float32)
    b_packed = jnp.zeros(((len(rest) + 1) * f_h, 1), jnp.float32)
    b_packed = b_packed.at[:b1.shape[0], 0].set(b1)
    for i, (w, b) in enumerate(rest):
        dout, din = w.shape
        w_rest = w_rest.at[i * f_h:i * f_h + dout, :din].set(w)
        b_packed = b_packed.at[(i + 1) * f_h:(i + 1) * f_h + dout, 0].set(b)
    return w1_packed, w_rest, b_packed


def _choose_tb(batch, max_tb):
    if batch <= 256:
        return batch                      # single tile, no batch padding, no wasted lanes
    # Keep >= 2 grid steps so ("parallel",) can shard tiles across v7x's two
    # TensorCores; cap the tile size to amortize the ~0.35 us/step overhead.
    return min(max_tb, _round_up(pl.cdiv(batch, 2), 128))


@functools.partial(jax.jit, static_argnames=("max_tb",))
def network_forward(state, w1_packed, w_rest, b_packed, *, max_tb=4096):
    """state: (B, input_size) f32 -> (B, 1) f32."""
    batch, input_size = state.shape
    f_h = w_rest.shape[1]

    tb = _choose_tb(batch, max_tb)
    grid = pl.cdiv(batch, tb)
    b_pad = grid * tb

    # Pad the batch dim only when needed (no HBM transpose pass at all).
    if b_pad != batch:
        state_p = jnp.zeros((b_pad, input_size), jnp.float32).at[:batch, :].set(state)
    else:
        state_p = state.astype(jnp.float32)

    out = pl.pallas_call(
        functools.partial(_mlp_kernel, f_h=f_h),
        out_shape=jax.ShapeDtypeStruct((1, b_pad), jnp.float32),
        grid_spec=pltpu.PrefetchScalarGridSpec(
            num_scalar_prefetch=0,
            grid=(grid,),
            in_specs=[
                pl.BlockSpec((tb, input_size), lambda g: (g, 0)),   # batch tile, natural layout
                pl.BlockSpec(w1_packed.shape, lambda g: (0, 0)),    # fc1 weight: VMEM-resident
                pl.BlockSpec(w_rest.shape, lambda g: (0, 0)),       # fc2..fc5:   VMEM-resident
                pl.BlockSpec(b_packed.shape, lambda g: (0, 0)),     # biases:     VMEM-resident
            ],
            out_specs=pl.BlockSpec((1, tb), lambda g: (0, g)),      # lane-dense output
        ),
        compiler_params=pltpu.CompilerParams(
            dimension_semantics=("parallel",),        # batch tiles shard across TCs on v7x
            vmem_limit_bytes=32 * 1024 * 1024,        # headroom for large tb (v5e default 16 MiB)
        ),
    )(state_p, w1_packed, w_rest, b_packed)

    return out[0, :batch].reshape(batch, 1)


def init_params(key, input_size):
    """torch.nn.Linear default init: W (out,in), b (out,), U[-1/sqrt(in), 1/sqrt(in)]."""
    dims = [(10, input_size), (20, 10), (20, 20), (10, 20), (1, 10)]
    params = []
    for dout, din in dims:
        key, kw, kb = jax.random.split(key, 3)
        bound = 1.0 / (din ** 0.5)
        w = jax.random.uniform(kw, (dout, din), jnp.float32, -bound, bound)
        b = jax.random.uniform(kb, (dout,), jnp.float32, -bound, bound)
        params.append((w, b))
    return params


def _reference_forward(state, params):
    (w1, b1), (w2, b2), (w3, b3), (w4, b4), (w5, b5) = params
    x = jnp.maximum(state @ w1.T + b1, 0.0)
    x = jnp.maximum(x @ w2.T + b2, 0.0)
    x = jnp.maximum(x @ w3.T + b3, 0.0)
    x = jnp.tanh(x @ w4.T + b4)
    return x @ w5.T + b5


if __name__ == "__main__":
    key = jax.random.PRNGKey(0)
    input_size = 32

    key, k_params = jax.random.split(key)
    params = init_params(k_params, input_size)
    w1_packed, w_rest, b_packed = pack_params(params)

    # Small single-tile batch (grid=1, no padding) and a multi-tile batch
    # (grid=2, batch padding + "parallel" sharding path).
    for batch in (8, 384):
        key, k_state = jax.random.split(key)
        state = jax.random.normal(k_state, (batch, input_size), jnp.float32)

        q_values = network_forward(state, w1_packed, w_rest, b_packed)
        q_values = jax.block_until_ready(q_values)

        ref = _reference_forward(state, params)
        assert q_values.shape == (batch, 1)
        assert jnp.allclose(q_values, ref, atol=1e-5, rtol=1e-5)

    print("KERNEL_OK")
</pallas_src>

<mosaic_0001>
module attributes {stable_mosaic.version = 11 : i64} {
  func.func @_mlp_kernel(%arg0: i32, %arg1: memref<8x32xf32, #tpu.memory_space<vmem>>, %arg2: memref<24x32xf32, #tpu.memory_space<vmem>>, %arg3: memref<96x24xf32, #tpu.memory_space<vmem>>, %arg4: memref<120x1xf32, #tpu.memory_space<vmem>>, %arg5: memref<1x8xf32, #tpu.memory_space<vmem>>) attributes {dimension_semantics = [#tpu.dimension_semantics<parallel>], iteration_bounds = array<i64: 1>, scalar_prefetch = 0 : i64, scratch_operands = 0 : i64, tpu.core_type = #tpu.core_type<tc>, window_params = [{transform_indices = @transform_0, window_bounds = array<i64: 8, 32>}, {pipeline_mode = #tpu.pipeline_mode<synchronous>, transform_indices = @transform_1, window_bounds = array<i64: 24, 32>}, {pipeline_mode = #tpu.pipeline_mode<synchronous>, transform_indices = @transform_2, window_bounds = array<i64: 96, 24>}, {pipeline_mode = #tpu.pipeline_mode<synchronous>, transform_indices = @transform_3, window_bounds = array<i64: 120, 1>}, {transform_indices = @transform_4, window_bounds = array<i64: 1, 8>}]} {
    %c0 = arith.constant 0 : index
    %c0_0 = arith.constant 0 : index
    %0 = vector.load %arg1[%c0, %c0_0] : memref<8x32xf32, #tpu.memory_space<vmem>>, vector<8x32xf32>
    %c0_1 = arith.constant 0 : index
    %c0_2 = arith.constant 0 : index
    %1 = vector.load %arg2[%c0_1, %c0_2] : memref<24x32xf32, #tpu.memory_space<vmem>>, vector<24x32xf32>
    %cst = arith.constant dense<0.000000e+00> : vector<24x8xf32>
    %2 = tpu.matmul %1, %0, %cst {dimension_numbers = #tpu.dot_dimension_numbers<[1], [1], [0], [0], [0, 0, 1, 0], [], []>} : vector<24x32xf32>, vector<8x32xf32>, vector<24x8xf32> -> vector<24x8xf32>
    %c0_3 = arith.constant 0 : index
    %c0_4 = arith.constant 0 : index
    %3 = vector.load %arg4[%c0_3, %c0_4] : memref<120x1xf32, #tpu.memory_space<vmem>>, vector<24x1xf32>
    %4 = vector.broadcast %3 : vector<24x1xf32> to vector<24x8xf32>
    %5 = arith.addf %2, %4 : vector<24x8xf32>
    %cst_5 = arith.constant 0.000000e+00 : f32
    %6 = vector.broadcast %cst_5 : f32 to vector<24x8xf32>
    %7 = arith.maximumf %5, %6 : vector<24x8xf32>
    %c0_6 = arith.constant 0 : index
    %c0_7 = arith.constant 0 : index
    %8 = vector.load %arg3[%c0_6, %c0_7] : memref<96x24xf32, #tpu.memory_space<vmem>>, vector<24x24xf32>
    %c24 = arith.constant 24 : index
    %c0_8 = arith.constant 0 : index
    %9 = vector.load %arg4[%c24, %c0_8] : memref<120x1xf32, #tpu.memory_space<vmem>>, vector<24x1xf32>
    %cst_9 = arith.constant dense<0.000000e+00> : vector<24x8xf32>
    %10 = tpu.matmul %8, %7, %cst_9 {dimension_numbers = #tpu.dot_dimension_numbers<[1], [0], [0], [1], [0, 0, 1, 1], [], []>} : vector<24x24xf32>, vector<24x8xf32>, vector<24x8xf32> -> vector<24x8xf32>
    %11 = vector.broadcast %9 : vector<24x1xf32> to vector<24x8xf32>
    %12 = arith.addf %10, %11 : vector<24x8xf32>
    %cst_10 = arith.constant 0.000000e+00 : f32
    %13 = vector.broadcast %cst_10 : f32 to vector<24x8xf32>
    %14 = arith.maximumf %12, %13 : vector<24x8xf32>
    %c24_11 = arith.constant 24 : index
    %c0_12 = arith.constant 0 : index
    %15 = vector.load %arg3[%c24_11, %c0_12] : memref<96x24xf32, #tpu.memory_space<vmem>>, vector<24x24xf32>
    %c48 = arith.constant 48 : index
    %c0_13 = arith.constant 0 : index
    %16 = vector.load %arg4[%c48, %c0_13] : memref<120x1xf32, #tpu.memory_space<vmem>>, vector<24x1xf32>
    %cst_14 = arith.constant dense<0.000000e+00> : vector<24x8xf32>
    %17 = tpu.matmul %15, %14, %cst_14 {dimension_numbers = #tpu.dot_dimension_numbers<[1], [0], [0], [1], [0, 0, 1, 1], [], []>} : vector<24x24xf32>, vector<24x8xf32>, vector<24x8xf32> -> vector<24x8xf32>
    %18 = vector.broadcast %16 : vector<24x1xf32> to vector<24x8xf32>
    %19 = arith.addf %17, %18 : vector<24x8xf32>
    %cst_15 = arith.constant 0.000000e+00 : f32
    %20 = vector.broadcast %cst_15 : f32 to vector<24x8xf32>
    %21 = arith.maximumf %19, %20 : vector<24x8xf32>
    %c48_16 = arith.constant 48 : index
    %c0_17 = arith.constant 0 : index
    %22 = vector.load %arg3[%c48_16, %c0_17] : memref<96x24xf32, #tpu.memory_space<vmem>>, vector<24x24xf32>
    %c72 = arith.constant 72 : index
    %c0_18 = arith.constant 0 : index
    %23 = vector.load %arg4[%c72, %c0_18] : memref<120x1xf32, #tpu.memory_space<vmem>>, vector<24x1xf32>
    %cst_19 = arith.constant dense<0.000000e+00> : vector<24x8xf32>
    %24 = tpu.matmul %22, %21, %cst_19 {dimension_numbers = #tpu.dot_dimension_numbers<[1], [0], [0], [1], [0, 0, 1, 1], [], []>} : vector<24x24xf32>, vector<24x8xf32>, vector<24x8xf32> -> vector<24x8xf32>
    %25 = vector.broadcast %23 : vector<24x1xf32> to vector<24x8xf32>
    %26 = arith.addf %24, %25 : vector<24x8xf32>
    %27 = math.tanh %26 : vector<24x8xf32>
    %c72_20 = arith.constant 72 : index
    %c0_21 = arith.constant 0 : index
    %28 = vector.load %arg3[%c72_20, %c0_21] : memref<96x24xf32, #tpu.memory_space<vmem>>, vector<24x24xf32>
    %c96 = arith.constant 96 : index
    %c0_22 = arith.constant 0 : index
    %29 = vector.load %arg4[%c96, %c0_22] : memref<120x1xf32, #tpu.memory_space<vmem>>, vector<24x1xf32>
    %cst_23 = arith.constant dense<0.000000e+00> : vector<24x8xf32>
    %30 = tpu.matmul %28, %27, %cst_23 {dimension_numbers = #tpu.dot_dimension_numbers<[1], [0], [0], [1], [0, 0, 1, 1], [], []>} : vector<24x24xf32>, vector<24x8xf32>, vector<24x8xf32> -> vector<24x8xf32>
    %31 = vector.broadcast %29 : vector<24x1xf32> to vector<24x8xf32>
    %32 = arith.addf %30, %31 : vector<24x8xf32>
    %33 = vector.extract_strided_slice %32 {offsets = [0, 0], sizes = [1, 8], strides = [1, 1]} : vector<24x8xf32> to vector<1x8xf32>
    %c0_24 = arith.constant 0 : index
    %c0_25 = arith.constant 0 : index
    %34 = vector.load %arg5[%c0_24, %c0_25] : memref<1x8xf32, #tpu.memory_space<vmem>>, vector<1x8xf32>
    tpu.vector_store %arg5[%c0_24, %c0_25], %33 {strides = array<i32>} : memref<1x8xf32, #tpu.memory_space<vmem>>, vector<1x8xf32>,
    return
  }
  func.func @transform_0(%arg0: i32) -> (i32, i32) {
    %c0_i32 = arith.constant 0 : i32
    %c0_i32_0 = arith.constant 0 : i32
    return %arg0, %c0_i32 : i32, i32
  }
  func.func @transform_1(%arg0: i32) -> (i32, i32) {
    %c0_i32 = arith.constant 0 : i32
    %c0_i32_0 = arith.constant 0 : i32
    %c0_i32_1 = arith.constant 0 : i32
    return %c0_i32, %c0_i32_0 : i32, i32
  }
  func.func @transform_2(%arg0: i32) -> (i32, i32) {
    %c0_i32 = arith.constant 0 : i32
    %c0_i32_0 = arith.constant 0 : i32
    %c0_i32_1 = arith.constant 0 : i32
    return %c0_i32, %c0_i32_0 : i32, i32
  }
  func.func @transform_3(%arg0: i32) -> (i32, i32) {
    %c0_i32 = arith.constant 0 : i32
    %c0_i32_0 = arith.constant 0 : i32
    %c0_i32_1 = arith.constant 0 : i32
    return %c0_i32, %c0_i32_0 : i32, i32
  }
  func.func @transform_4(%arg0: i32) -> (i32, i32) {
    %c0_i32 = arith.constant 0 : i32
    %c0_i32_0 = arith.constant 0 : i32
    return %c0_i32, %arg0 : i32, i32
  }
}

</mosaic_0001>

<llo_original>
// kernel: network_forward.1
$region0: #{network_forward.1}
  #allocation0 [shape = 'u32[]', space=smem, size = 0x4, offset = 0x4, fixed_abs, tag = 'smem constant byte address 0x4 - core index']
  #allocation1 [shape = 'u32[144,128]{1,0:T(1,128)}', space=vmem, size = 0x12000, scoped, tag = 'internal scratch']
  %s0 = inlined_call_operand.vmem [shape: f32[8,32], index: 0, kind: input, shape index: {}]
  %s1 = inlined_call_operand.vmem [shape: f32[24,32], index: 1, kind: input, shape index: {}]
  %s2 = inlined_call_operand.vmem [shape: f32[96,24], index: 2, kind: input, shape index: {}]
  %s3 = inlined_call_operand.vmem [shape: f32[120,1], index: 3, kind: input, shape index: {}]
  %s4 = inlined_call_operand.hbm [shape: f32[1,8], index: 4, kind: output, shape index: {}]
  %s5 = sld [smem:[#allocation0]]
  $region26: #{network_forward.1} parent=0
    _
  %s7 = ssub.s32 1, %s5
  %s8 = scalar_select 0, %s7, %s5
  $region1: #{network_forward.1} parent=0
    #allocation2 [shape = 'u8[512]{0}', space=vmem, size = 0x400, scoped, tag = 'output window, operand 0, single buffered']
    #allocation3 [shape = 's32[1]{0}', space=sflag, size = 0x4, scoped, tag = 'scoped memory for network_forward.1']
    %9 = vsyncpa [#allocation3], 0
    // Predicated region
    $region2: #{network_forward.1} parent=1 // pred_check
      _
    $region3: #{network_forward.1} parent=1 // pred_check_branch
      %11 = sbr.rel (0) target = $region5
    $region4: #{network_forward.1} parent=1 // pred_region
      _
    $region5: #{network_forward.1} parent=1 // pred_fallthru
      _
    // Predicated region
    $region6: #{network_forward.1} parent=1 // pred_check
      _
    $region7: #{network_forward.1} parent=1 // pred_check_branch
      %13 = sbr.rel (0) target = $region9
    $region8: #{network_forward.1} parent=1 // pred_region
      _
    $region9: #{network_forward.1} parent=1 // pred_fallthru
      _
    // Predicated region
    $region10: #{network_forward.1} parent=1 // pred_check
      _
    $region11: #{network_forward.1} parent=1 // pred_check_branch
      %15 = sbr.rel (0) target = $region13
    $region12: #{network_forward.1} parent=1 // pred_region
      _
    $region13: #{network_forward.1} parent=1 // pred_fallthru
      _
    // Predicated region
    $region14: #{network_forward.1} parent=1 // pred_check
      _
    $region15: #{network_forward.1} parent=1 // pred_check_branch
      %17 = sbr.rel (0) target = $region17
    $region16: #{network_forward.1} parent=1 // pred_region
      _
    $region17: #{network_forward.1} parent=1 // pred_fallthru
      _
    %v18 = vld [vmem:[%s0] sm:$0xff]
    %v19 = vld [vmem:[%s1] sm:$0xff]
    %v20 = vld [vmem:[%s1 + $0x8] sm:$0xff]
    %v21 = vld [vmem:[%s1 + $0x10] sm:$0xff]
    %v22 = vld [vmem:[%s3] sm:$0xff]
    %v23 = vld [vmem:[%s3 + $0x8] sm:$0xff]
    %v24 = vld [vmem:[%s3 + $0x10] sm:$0xff]
    %26 = vset.pattern.permute.xlu0 0
    %27 = vperm.xlu0 %26, %v22
    %v28 = vpop.permute.xlu0 %27
    %31 = vset.pattern.permute.xlu0 0
    %32 = vperm.xlu0 %31, %v23
    %v33 = vpop.permute.xlu0 %32
    %36 = vset.pattern.permute.xlu0 0
    %37 = vperm.xlu0 %36, %v24
    %v38 = vpop.permute.xlu0 %37
    %vm40 = vcmask 261120
    %v42 = vsel %vm40, %v19, 0
    %v45 = vsel %vm40, %v20, 0
    %v48 = vsel %vm40, %v21, 0
    %v51 = vsel %vm40, %v18, 0
    %53 = vmatprep.subr.mxu0 0.0
    %54 = vmatpush1.xpose.msra.mxu0 0.0
    %55 = vmatprep.subr.mxu0 0.0
    %56 = vmatpush1.xpose.msra.mxu0 0.0
    %57 = vmatprep.subr.mxu0 0.0
    %58 = vmatpush1.xpose.msra.mxu0 0.0
    %59 = vmatprep.subr.mxu0 0.0
    %60 = vmatpush1.xpose.msra.mxu0 0.0
    %61 = vmatprep.subr.mxu0 0.0
    %62 = vmatpush1.xpose.msra.mxu0 0.0
    %63 = vmatprep.subr.mxu0 0.0
    %64 = vmatpush1.xpose.msra.mxu0 0.0
    %65 = vmatprep.subr.mxu0 0.0
    %66 = vmatpush1.xpose.msra.mxu0 0.0
    %67 = vmatprep.subr.mxu0 0.0
    %68 = vmatpush1.xpose.msra.mxu0 0.0
    %69 = vmatprep.subr.mxu0 0.0
    %70 = vmatpush1.xpose.msra.mxu0 0.0
    %71 = vmatprep.subr.mxu0 0.0
    %72 = vmatpush1.xpose.msra.mxu0 0.0
    %73 = vmatprep.subr.mxu0 0.0
    %74 = vmatpush1.xpose.msra.mxu0 0.0
    %75 = vmatprep.subr.mxu0 0.0
    %76 = vmatpush1.xpose.msra.mxu0 0.0
    %77 = vmatprep.subr.mxu0 0.0
    %78 = vmatpush1.xpose.msra.mxu0 0.0
    %79 = vmatprep.subr.mxu0 0.0
    %80 = vmatpush1.xpose.msra.mxu0 0.0
    %81 = vmatprep.subr.mxu0 0.0
    %82 = vmatpush1.xpose.msra.mxu0 0.0
    %83 = vmatprep.subr.mxu0 0.0
    %84 = vmatpush1.xpose.msra.mxu0 %v51
    %85 = vmatprep.subr.mxu0 0.0
    %86 = vmatpush2.xpose.msra.mxu0 0.0
    %87 = vmatprep.subr.mxu0 0.0
    %88 = vmatpush2.xpose.msra.mxu0 0.0
    %89 = vmatprep.subr.mxu0 0.0
    %90 = vmatpush2.xpose.msra.mxu0 0.0
    %91 = vmatprep.subr.mxu0 0.0
    %92 = vmatpush2.xpose.msra.mxu0 0.0
    %93 = vmatprep.subr.mxu0 0.0
    %94 = vmatpush2.xpose.msra.mxu0 0.0
    %95 = vmatprep.subr.mxu0 0.0
    %96 = vmatpush2.xpose.msra.mxu0 0.0
    %97 = vmatprep.subr.mxu0 0.0
    %98 = vmatpush2.xpose.msra.mxu0 0.0
    %99 = vmatprep.subr.mxu0 0.0
    %100 = vmatpush2.xpose.msra.mxu0 0.0
    %101 = vmatprep.subr.mxu0 0.0
    %102 = vmatpush2.xpose.msra.mxu0 0.0
    %103 = vmatprep.subr.mxu0 0.0
    %104 = vmatpush2.xpose.msra.mxu0 0.0
    %105 = vmatprep.subr.mxu0 0.0
    %106 = vmatpush2.xpose.msra.mxu0 0.0
    %107 = vmatprep.subr.mxu0 0.0
    %108 = vmatpush2.xpose.msra.mxu0 0.0
    %109 = vmatprep.subr.mxu0 0.0
    %110 = vmatpush2.xpose.msra.mxu0 0.0
    %111 = vmatprep.subr.mxu0 0.0
    %112 = vmatpush2.xpose.msra.mxu0 0.0
    %113 = vmatprep.subr.mxu0 0.0
    %114 = vmatpush2.xpose.msra.mxu0 0.0
    %115 = vmatprep.subr.mxu0 0.0
    %116 = vmatpush2.xpose.msra.mxu0 0.0
    %117 = vmatprep.mubr.f32.mxu0 0.0
    %118 = vmatmul.mubr.f32.gmra.mxu0 %v42
    %v119 = vpop.f32.mrf.mxu0
    %v120 = vadd.f32 %v28, %v119
    %v121 = vpop.f32.mrf.mxu0
    %122 = vmatprep.mubr.f32.mxu0 0.0
    %123 = vmatmul.mubr.f32.gmra.mxu0 %v45
    %v124 = vpop.f32.mrf.mxu0
    %v125 = vadd.f32 %v33, %v124
    %v126 = vpop.f32.mrf.mxu0
    %127 = vmatprep.mubr.f32.mxu0 0.0
    %128 = vmatmul.mubr.f32.gmra.mxu0 %v48
    %v129 = vpop.f32.mrf.mxu0
    %v130 = vadd.f32 %v38, %v129
    %v131 = vpop.f32.mrf.mxu0
    %132 = vdwg.mxu0
    %v133 = vmax.f32 %v120, 0.0
    %v134 = vmax.f32 %v125, 0.0
    %v135 = vmax.f32 %v130, 0.0
    %v136 = vld [vmem:[%s2] sm:$0xff]
    %v137 = vld [vmem:[%s2 + $0x8] sm:$0xff]
    %v138 = vld [vmem:[%s2 + $0x10] sm:$0xff]
    %v139 = vld [vmem:[%s3 + $0x18] sm:$0xff]
    %v140 = vld [vmem:[%s3 + $0x20] sm:$0xff]
    %v141 = vld [vmem:[%s3 + $0x28] sm:$0xff]
    %143 = vset.pattern.permute.xlu0 0
    %144 = vperm.xlu0 %143, %v139
    %v145 = vpop.permute.xlu0 %144
    %148 = vset.pattern.permute.xlu0 0
    %149 = vperm.xlu0 %148, %v140
    %v150 = vpop.permute.xlu0 %149
    %153 = vset.pattern.permute.xlu0 0
    %154 = vperm.xlu0 %153, %v141
    %v155 = vpop.permute.xlu0 %154
    %vm157 = vcmask 195584
    %v159 = vsel %vm157, %v136, 0
    %v162 = vsel %vm157, %v137, 0
    %v165 = vsel %vm157, %v138, 0
    %167 = vmatprep.subr.mxu0 0.0
    %168 = vmatpush1.msra.mxu0 0.0
    %169 = vmatprep.subr.mxu0 0.0
    %170 = vmatpush1.msra.mxu0 0.0
    %171 = vmatprep.subr.mxu0 0.0
    %172 = vmatpush1.msra.mxu0 0.0
    %173 = vmatprep.subr.mxu0 0.0
    %174 = vmatpush1.msra.mxu0 0.0
    %175 = vmatprep.subr.mxu0 0.0
    %176 = vmatpush1.msra.mxu0 0.0
    %177 = vmatprep.subr.mxu0 0.0
    %178 = vmatpush1.msra.mxu0 0.0
    %179 = vmatprep.subr.mxu0 0.0
    %180 = vmatpush1.msra.mxu0 0.0
    %181 = vmatprep.subr.mxu0 0.0
    %182 = vmatpush1.msra.mxu0 0.0
    %183 = vmatprep.subr.mxu0 0.0
    %184 = vmatpush1.msra.mxu0 0.0
    %185 = vmatprep.subr.mxu0 0.0
    %186 = vmatpush1.msra.mxu0 0.0
    %187 = vmatprep.subr.mxu0 0.0
    %188 = vmatpush1.msra.mxu0 0.0
    %189 = vmatprep.subr.mxu0 0.0
    %190 = vmatpush1.msra.mxu0 0.0
    %191 = vmatprep.subr.mxu0 0.0
    %192 = vmatpush1.msra.mxu0 0.0
    %193 = vmatprep.subr.mxu0 0.0
    %194 = vmatpush1.msra.mxu0 %v135
    %195 = vmatprep.subr.mxu0 0.0
    %196 = vmatpush1.msra.mxu0 %v134
    %197 = vmatprep.subr.mxu0 0.0
    %198 = vmatpush1.msra.mxu0 %v133
    %199 = vmatprep.subr.mxu0 0.0
    %200 = vmatpush2.msra.mxu0 0.0
    %201 = vmatprep.subr.mxu0 0.0
    %202 = vmatpush2.msra.mxu0 0.0
    %203 = vmatprep.subr.mxu0 0.0
    %204 = vmatpush2.msra.mxu0 0.0
    %205 = vmatprep.subr.mxu0 0.0
    %206 = vmatpush2.msra.mxu0 0.0
    %207 = vmatprep.subr.mxu0 0.0
    %208 = vmatpush2.msra.mxu0 0.0
    %209 = vmatprep.subr.mxu0 0.0
    %210 = vmatpush2.msra.mxu0 0.0
    %211 = vmatprep.subr.mxu0 0.0
    %212 = vmatpush2.msra.mxu0 0.0
    %213 = vmatprep.subr.mxu0 0.0
    %214 = vmatpush2.msra.mxu0 0.0
    %215 = vmatprep.subr.mxu0 0.0
    %216 = vmatpush2.msra.mxu0 0.0
    %217 = vmatprep.subr.mxu0 0.0
    %218 = vmatpush2.msra.mxu0 0.0
    %219 = vmatprep.subr.mxu0 0.0
    %220 = vmatpush2.msra.mxu0 0.0
    %221 = vmatprep.subr.mxu0 0.0
    %222 = vmatpush2.msra.mxu0 0.0
    %223 = vmatprep.subr.mxu0 0.0
    %224 = vmatpush2.msra.mxu0 0.0
    %225 = vmatprep.subr.mxu0 0.0
    %226 = vmatpush2.msra.mxu0 0.0
    %227 = vmatprep.subr.mxu0 0.0
    %228 = vmatpush2.msra.mxu0 0.0
    %229 = vmatprep.subr.mxu0 0.0
    %230 = vmatpush2.msra.mxu0 0.0
    %231 = vmatprep.mubr.f32.mxu0 0.0
    %232 = vmatmul.mubr.f32.gmra.mxu0 %v159
    %v233 = vpop.f32.mrf.mxu0
    %v234 = vadd.f32 %v145, %v233
    %v235 = vpop.f32.mrf.mxu0
    %236 = vmatprep.mubr.f32.mxu0 0.0
    %237 = vmatmul.mubr.f32.gmra.mxu0 %v162
    %v238 = vpop.f32.mrf.mxu0
    %v239 = vadd.f32 %v150, %v238
    %v240 = vpop.f32.mrf.mxu0
    %241 = vmatprep.mubr.f32.mxu0 0.0
    %242 = vmatmul.mubr.f32.gmra.mxu0 %v165
    %v243 = vpop.f32.mrf.mxu0
    %v244 = vadd.f32 %v155, %v243
    %v245 = vpop.f32.mrf.mxu0
    %246 = vdwg.mxu0
    %v247 = vmax.f32 %v234, 0.0
    %v248 = vmax.f32 %v239, 0.0
    %v249 = vmax.f32 %v244, 0.0
    %v250 = vld [vmem:[%s2 + $0x18] sm:$0xff]
    %v251 = vld [vmem:[%s2 + $0x20] sm:$0xff]
    %v252 = vld [vmem:[%s2 + $0x28] sm:$0xff]
    %v253 = vld [vmem:[%s3 + $0x30] sm:$0xff]
    %v254 = vld [vmem:[%s3 + $0x38] sm:$0xff]
    %v255 = vld [vmem:[%s3 + $0x40] sm:$0xff]
    %257 = vset.pattern.permute.xlu0 0
    %258 = vperm.xlu0 %257, %v253
    %v259 = vpop.permute.xlu0 %258
    %262 = vset.pattern.permute.xlu0 0
    %263 = vperm.xlu0 %262, %v254
    %v264 = vpop.permute.xlu0 %263
    %267 = vset.pattern.permute.xlu0 0
    %268 = vperm.xlu0 %267, %v255
    %v269 = vpop.permute.xlu0 %268
    %v272 = vsel %vm157, %v250, 0
    %v275 = vsel %vm157, %v251, 0
    %v278 = vsel %vm157, %v252, 0
    %280 = vmatprep.subr.mxu0 0.0
    %281 = vmatpush1.msra.mxu0 0.0
    %282 = vmatprep.subr.mxu0 0.0
    %283 = vmatpush1.msra.mxu0 0.0
    %284 = vmatprep.subr.mxu0 0.0
    %285 = vmatpush1.msra.mxu0 0.0
    %286 = vmatprep.subr.mxu0 0.0
    %287 = vmatpush1.msra.mxu0 0.0
    %288 = vmatprep.subr.mxu0 0.0
    %289 = vmatpush1.msra.mxu0 0.0
    %290 = vmatprep.subr.mxu0 0.0
    %291 = vmatpush1.msra.mxu0 0.0
    %292 = vmatprep.subr.mxu0 0.0
    %293 = vmatpush1.msra.mxu0 0.0
    %294 = vmatprep.subr.mxu0 0.0
    %295 = vmatpush1.msra.mxu0 0.0
    %296 = vmatprep.subr.mxu0 0.0
    %297 = vmatpush1.msra.mxu0 0.0
    %298 = vmatprep.subr.mxu0 0.0
    %299 = vmatpush1.msra.mxu0 0.0
    %300 = vmatprep.subr.mxu0 0.0
    %301 = vmatpush1.msra.mxu0 0.0
    %302 = vmatprep.subr.mxu0 0.0
    %303 = vmatpush1.msra.mxu0 0.0
    %304 = vmatprep.subr.mxu0 0.0
    %305 = vmatpush1.msra.mxu0 0.0
    %306 = vmatprep.subr.mxu0 0.0
    %307 = vmatpush1.msra.mxu0 %v249
    %308 = vmatprep.subr.mxu0 0.0
    %309 = vmatpush1.msra.mxu0 %v248
    %310 = vmatprep.subr.mxu0 0.0
    %311 = vmatpush1.msra.mxu0 %v247
    %312 = vmatprep.subr.mxu0 0.0
    %313 = vmatpush2.msra.mxu0 0.0
    %314 = vmatprep.subr.mxu0 0.0
    %315 = vmatpush2.msra.mxu0 0.0
    %316 = vmatprep.subr.mxu0 0.0
    %317 = vmatpush2.msra.mxu0 0.0
    %318 = vmatprep.subr.mxu0 0.0
    %319 = vmatpush2.msra.mxu0 0.0
    %320 = vmatprep.subr.mxu0 0.0
    %321 = vmatpush2.msra.mxu0 0.0
    %322 = vmatprep.subr.mxu0 0.0
    %323 = vmatpush2.msra.mxu0 0.0
    %324 = vmatprep.subr.mxu0 0.0
    %325 = vmatpush2.msra.mxu0 0.0
    %326 = vmatprep.subr.mxu0 0.0
    %327 = vmatpush2.msra.mxu0 0.0
    %328 = vmatprep.subr.mxu0 0.0
    %329 = vmatpush2.msra.mxu0 0.0
    %330 = vmatprep.subr.mxu0 0.0
    %331 = vmatpush2.msra.mxu0 0.0
    %332 = vmatprep.subr.mxu0 0.0
    %333 = vmatpush2.msra.mxu0 0.0
    %334 = vmatprep.subr.mxu0 0.0
    %335 = vmatpush2.msra.mxu0 0.0
    %336 = vmatprep.subr.mxu0 0.0
    %337 = vmatpush2.msra.mxu0 0.0
    %338 = vmatprep.subr.mxu0 0.0
    %339 = vmatpush2.msra.mxu0 0.0
    %340 = vmatprep.subr.mxu0 0.0
    %341 = vmatpush2.msra.mxu0 0.0
    %342 = vmatprep.subr.mxu0 0.0
    %343 = vmatpush2.msra.mxu0 0.0
    %344 = vmatprep.mubr.f32.mxu0 0.0
    %345 = vmatmul.mubr.f32.gmra.mxu0 %v272
    %v346 = vpop.f32.mrf.mxu0
    %v347 = vadd.f32 %v259, %v346
    %v348 = vpop.f32.mrf.mxu0
    %349 = vmatprep.mubr.f32.mxu0 0.0
    %350 = vmatmul.mubr.f32.gmra.mxu0 %v275
    %v351 = vpop.f32.mrf.mxu0
    %v352 = vadd.f32 %v264, %v351
    %v353 = vpop.f32.mrf.mxu0
    %354 = vmatprep.mubr.f32.mxu0 0.0
    %355 = vmatmul.mubr.f32.gmra.mxu0 %v278
    %v356 = vpop.f32.mrf.mxu0
    %v357 = vadd.f32 %v269, %v356
    %v358 = vpop.f32.mrf.mxu0
    %359 = vdwg.mxu0
    %v360 = vmax.f32 %v347, 0.0
    %v361 = vmax.f32 %v352, 0.0
    %v362 = vmax.f32 %v357, 0.0
    %v363 = vld [vmem:[%s2 + $0x30] sm:$0xff]
    %v364 = vld [vmem:[%s2 + $0x38] sm:$0xff]
    %v365 = vld [vmem:[%s2 + $0x40] sm:$0xff]
    %v366 = vld [vmem:[%s3 + $0x48] sm:$0xff]
    %v367 = vld [vmem:[%s3 + $0x50] sm:$0xff]
    %v368 = vld [vmem:[%s3 + $0x58] sm:$0xff]
    %370 = vset.pattern.permute.xlu0 0
    %371 = vperm.xlu0 %370, %v366
    %v372 = vpop.permute.xlu0 %371
    %375 = vset.pattern.permute.xlu0 0
    %376 = vperm.xlu0 %375, %v367
    %v377 = vpop.permute.xlu0 %376
    %380 = vset.pattern.permute.xlu0 0
    %381 = vperm.xlu0 %380, %v368
    %v382 = vpop.permute.xlu0 %381
    %v385 = vsel %vm157, %v363, 0
    %v388 = vsel %vm157, %v364, 0
    %v391 = vsel %vm157, %v365, 0
    %393 = vmatprep.subr.mxu0 0.0
    %394 = vmatpush1.msra.mxu0 0.0
    %395 = vmatprep.subr.mxu0 0.0
    %396 = vmatpush1.msra.mxu0 0.0
    %397 = vmatprep.subr.mxu0 0.0
    %398 = vmatpush1.msra.mxu0 0.0
    %399 = vmatprep.subr.mxu0 0.0
    %400 = vmatpush1.msra.mxu0 0.0
    %401 = vmatprep.subr.mxu0 0.0
    %402 = vmatpush1.msra.mxu0 0.0
    %403 = vmatprep.subr.mxu0 0.0
    %404 = vmatpush1.msra.mxu0 0.0
    %405 = vmatprep.subr.mxu0 0.0
    %406 = vmatpush1.msra.mxu0 0.0
    %407 = vmatprep.subr.mxu0 0.0
    %408 = vmatpush1.msra.mxu0 0.0
    %409 = vmatprep.subr.mxu0 0.0
    %410 = vmatpush1.msra.mxu0 0.0
    %411 = vmatprep.subr.mxu0 0.0
    %412 = vmatpush1.msra.mxu0 0.0
    %413 = vmatprep.subr.mxu0 0.0
    %414 = vmatpush1.msra.mxu0 0.0
    %415 = vmatprep.subr.mxu0 0.0
    %416 = vmatpush1.msra.mxu0 0.0
    %417 = vmatprep.subr.mxu0 0.0
    %418 = vmatpush1.msra.mxu0 0.0
    %419 = vmatprep.subr.mxu0 0.0
    %420 = vmatpush1.msra.mxu0 %v362
    %421 = vmatprep.subr.mxu0 0.0
    %422 = vmatpush1.msra.mxu0 %v361
    %423 = vmatprep.subr.mxu0 0.0
    %424 = vmatpush1.msra.mxu0 %v360
    %425 = vmatprep.subr.mxu0 0.0
    %426 = vmatpush2.msra.mxu0 0.0
    %427 = vmatprep.subr.mxu0 0.0
    %428 = vmatpush2.msra.mxu0 0.0
    %429 = vmatprep.subr.mxu0 0.0
    %430 = vmatpush2.msra.mxu0 0.0
    %431 = vmatprep.subr.mxu0 0.0
    %432 = vmatpush2.msra.mxu0 0.0
    %433 = vmatprep.subr.mxu0 0.0
    %434 = vmatpush2.msra.mxu0 0.0
    %435 = vmatprep.subr.mxu0 0.0
    %436 = vmatpush2.msra.mxu0 0.0
    %437 = vmatprep.subr.mxu0 0.0
    %438 = vmatpush2.msra.mxu0 0.0
    %439 = vmatprep.subr.mxu0 0.0
    %440 = vmatpush2.msra.mxu0 0.0
    %441 = vmatprep.subr.mxu0 0.0
    %442 = vmatpush2.msra.mxu0 0.0
    %443 = vmatprep.subr.mxu0 0.0
    %444 = vmatpush2.msra.mxu0 0.0
    %445 = vmatprep.subr.mxu0 0.0
    %446 = vmatpush2.msra.mxu0 0.0
    %447 = vmatprep.subr.mxu0 0.0
    %448 = vmatpush2.msra.mxu0 0.0
    %449 = vmatprep.subr.mxu0 0.0
    %450 = vmatpush2.msra.mxu0 0.0
    %451 = vmatprep.subr.mxu0 0.0
    %452 = vmatpush2.msra.mxu0 0.0
    %453 = vmatprep.subr.mxu0 0.0
    %454 = vmatpush2.msra.mxu0 0.0
    %455 = vmatprep.subr.mxu0 0.0
    %456 = vmatpush2.msra.mxu0 0.0
    %457 = vmatprep.mubr.f32.mxu0 0.0
    %458 = vmatmul.mubr.f32.gmra.mxu0 %v385
    %v459 = vpop.f32.mrf.mxu0
    %v460 = vadd.f32 %v372, %v459
    %v461 = vpop.f32.mrf.mxu0
    %462 = vmatprep.mubr.f32.mxu0 0.0
    %463 = vmatmul.mubr.f32.gmra.mxu0 %v388
    %v464 = vpop.f32.mrf.mxu0
    %v465 = vadd.f32 %v377, %v464
    %v466 = vpop.f32.mrf.mxu0
    %467 = vmatprep.mubr.f32.mxu0 0.0
    %468 = vmatmul.mubr.f32.gmra.mxu0 %v391
    %v469 = vpop.f32.mrf.mxu0
    %v470 = vadd.f32 %v382, %v469
    %v471 = vpop.f32.mrf.mxu0
    %472 = vdwg.mxu0
    %v473 = vtanh.pop %v460
    %v474 = vtanh.pop %v465
    %v475 = vtanh.pop %v470
    %v476 = vld [vmem:[%s2 + $0x48] sm:$0xff]
    %v477 = vld [vmem:[%s2 + $0x50] sm:$0xff]
    %v478 = vld [vmem:[%s2 + $0x58] sm:$0xff]
    %v479 = vld [vmem:[%s3 + $0x60] sm:$0xff]
    %v480 = vld [vmem:[%s3 + $0x68] sm:$0xff]
    %v481 = vld [vmem:[%s3 + $0x70] sm:$0xff]
    %483 = vset.pattern.permute.xlu0 0
    %484 = vperm.xlu0 %483, %v479
    %v485 = vpop.permute.xlu0 %484
    %488 = vset.pattern.permute.xlu0 0
    %489 = vperm.xlu0 %488, %v480
    %v490 = vpop.permute.xlu0 %489
    %492 = vset.pattern.permute.xlu0 0
    %493 = vperm.xlu0 %492, %v481
    %v494 = vpop.permute.xlu0 %493
    %v496 = vsel %vm157, %v476, 0
    %v499 = vsel %vm157, %v477, 0
    %v502 = vsel %vm157, %v478, 0
    %504 = vmatprep.subr.mxu0 0.0
    %505 = vmatpush1.msra.mxu0 0.0
    %506 = vmatprep.subr.mxu0 0.0
    %507 = vmatpush1.msra.mxu0 0.0
    %508 = vmatprep.subr.mxu0 0.0
    %509 = vmatpush1.msra.mxu0 0.0
    %510 = vmatprep.subr.mxu0 0.0
    %511 = vmatpush1.msra.mxu0 0.0
    %512 = vmatprep.subr.mxu0 0.0
    %513 = vmatpush1.msra.mxu0 0.0
    %514 = vmatprep.subr.mxu0 0.0
    %515 = vmatpush1.msra.mxu0 0.0
    %516 = vmatprep.subr.mxu0 0.0
    %517 = vmatpush1.msra.mxu0 0.0
    %518 = vmatprep.subr.mxu0 0.0
    %519 = vmatpush1.msra.mxu0 0.0
    %520 = vmatprep.subr.mxu0 0.0
    %521 = vmatpush1.msra.mxu0 0.0
    %522 = vmatprep.subr.mxu0 0.0
    %523 = vmatpush1.msra.mxu0 0.0
    %524 = vmatprep.subr.mxu0 0.0
    %525 = vmatpush1.msra.mxu0 0.0
    %526 = vmatprep.subr.mxu0 0.0
    %527 = vmatpush1.msra.mxu0 0.0
    %528 = vmatprep.subr.mxu0 0.0
    %529 = vmatpush1.msra.mxu0 0.0
    %530 = vmatprep.subr.mxu0 0.0
    %531 = vmatpush1.msra.mxu0 %v475
    %532 = vmatprep.subr.mxu0 0.0
    %533 = vmatpush1.msra.mxu0 %v474
    %534 = vmatprep.subr.mxu0 0.0
    %535 = vmatpush1.msra.mxu0 %v473
    %536 = vmatprep.subr.mxu0 0.0
    %537 = vmatpush2.msra.mxu0 0.0
    %538 = vmatprep.subr.mxu0 0.0
    %539 = vmatpush2.msra.mxu0 0.0
    %540 = vmatprep.subr.mxu0 0.0
    %541 = vmatpush2.msra.mxu0 0.0
    %542 = vmatprep.subr.mxu0 0.0
    %543 = vmatpush2.msra.mxu0 0.0
    %544 = vmatprep.subr.mxu0 0.0
    %545 = vmatpush2.msra.mxu0 0.0
    %546 = vmatprep.subr.mxu0 0.0
    %547 = vmatpush2.msra.mxu0 0.0
    %548 = vmatprep.subr.mxu0 0.0
    %549 = vmatpush2.msra.mxu0 0.0
    %550 = vmatprep.subr.mxu0 0.0
    %551 = vmatpush2.msra.mxu0 0.0
    %552 = vmatprep.subr.mxu0 0.0
    %553 = vmatpush2.msra.mxu0 0.0
    %554 = vmatprep.subr.mxu0 0.0
    %555 = vmatpush2.msra.mxu0 0.0
    %556 = vmatprep.subr.mxu0 0.0
    %557 = vmatpush2.msra.mxu0 0.0
    %558 = vmatprep.subr.mxu0 0.0
    %559 = vmatpush2.msra.mxu0 0.0
    %560 = vmatprep.subr.mxu0 0.0
    %561 = vmatpush2.msra.mxu0 0.0
    %562 = vmatprep.subr.mxu0 0.0
    %563 = vmatpush2.msra.mxu0 0.0
    %564 = vmatprep.subr.mxu0 0.0
    %565 = vmatpush2.msra.mxu0 0.0
    %566 = vmatprep.subr.mxu0 0.0
    %567 = vmatpush2.msra.mxu0 0.0
    %568 = vmatprep.mubr.f32.mxu0 0.0
    %569 = vmatmul.mubr.f32.gmra.mxu0 %v496
    %v570 = vpop.f32.mrf.mxu0
    %v571 = vadd.f32 %v485, %v570
    %v572 = vpop.f32.mrf.mxu0
    %573 = vmatprep.mubr.f32.mxu0 0.0
    %574 = vmatmul.mubr.f32.gmra.mxu0 %v499
    %v575 = vpop.f32.mrf.mxu0
    %v576 = vpop.f32.mrf.mxu0
    %577 = vmatprep.mubr.f32.mxu0 0.0
    %578 = vmatmul.mubr.f32.gmra.mxu0 %v502
    %v579 = vpop.f32.mrf.mxu0
    %v580 = vpop.f32.mrf.mxu0
    %581 = vdwg.mxu0
    %vm582 = vcmask 57344
    %583 = vst.msk [vmem:[#allocation2] sm:$0x1] %vm582, %v571
    // Predicated region
    $region18: #{network_forward.1} parent=1 // pred_check
      _
    $region19: #{network_forward.1} parent=1 // pred_check_branch
      %585 = sbr.rel (0) target = $region21
    $region20: #{network_forward.1} parent=1 // pred_region
      %s587 = ssub.s32 16, 16
      %588 = vsyncadd [#allocation3], %s587
      %s590 = sshll.u32 [#allocation2], 4
      %s591 = int_to_ptr.vmem [resolvable:$true] %s590
      %593 = dma.vmem_to_hbm [thread:$0]  %s591, 16, %s4, [#allocation3]
    $region21: #{network_forward.1} parent=1 // pred_fallthru
      _
    // Predicated region
    $region22: #{network_forward.1} parent=1 // pred_check
      _
    $region23: #{network_forward.1} parent=1 // pred_check_branch
      %595 = sbr.rel (0) target = $region25
    $region24: #{network_forward.1} parent=1 // pred_region
      %596 = dma.done [#allocation3], 16
    $region25: #{network_forward.1} parent=1 // pred_fallthru
      _
    %597 = vsyncpa [#allocation3], 1

</llo_original>
